<compile_context>
chip_gen: v7x
topology: tpu7x:2x2x1
jax: 0.10.0
libtpu: 0.0.40
codegen_flags: <defaults>
</compile_context>

<pallas_src>
import functools

import jax
import jax.numpy as jnp
from jax.experimental import pallas as pl
from jax.experimental.pallas import tpu as pltpu


_BLOCK_BUDGET_BYTES = 8 * 1024 * 1024   # per logits block (double-buffered by Pallas)
_MIN_SPLIT_BYTES = 1 * 1024 * 1024      # don't bother splitting tiny problems
_VMEM_LIMIT_CAP = 48 * 1024 * 1024      # below v7x's 64 MiB physical VMEM
_VMEM_LIMIT_FLOOR = 32 * 1024 * 1024


def _ce_sum_kernel(x_ref, t_ref, out_ref, *, n_rows, row_tile,
                   tiles_per_split, need_mask):
    """Accumulate the un-normalized cross-entropy sum for one core split.

    x_ref  : (1, TN, C) logits tile (any float dtype; promoted to f32 here)
    t_ref  : (TN, 1) int32 target class per row
    out_ref: (1, 1, 1) f32 running partial for this core split
    """
    c = pl.program_id(0)   # core split (parallel)
    k = pl.program_id(1)   # logits slab (live / dead)
    i = pl.program_id(2)   # row tile inside this split

    @pl.when(jnp.logical_and(k == 0, i == 0))
    def _init():
        out_ref[...] = jnp.zeros_like(out_ref)

    x = x_ref[0].astype(jnp.float32)                        # (TN, C)
    t = t_ref[...]                                          # (TN, 1)

    # Numerically-stable logsumexp along the class (lane) axis.
    m = jnp.max(x, axis=-1, keepdims=True)                  # (TN, 1)
    lse = m + jnp.log(jnp.sum(jnp.exp(x - m), axis=-1, keepdims=True))

    # Target logit via one-hot compare (vectorized; no per-row scalar gather).
    cls = jax.lax.broadcasted_iota(jnp.int32, x.shape, 1)   # (TN, C)
    tgt = jnp.sum(jnp.where(cls == t, x, 0.0), axis=-1, keepdims=True)

    per_row = lse - tgt                                     # (TN, 1)

    if need_mask:
        # Mask rows past the batch end: partial last tile and any clamped
        # duplicate tile produced by the 2-way core split. Statically skipped
        # when the tiling covers the batch exactly.
        row = ((c * tiles_per_split + i) * row_tile
               + jax.lax.broadcasted_iota(jnp.int32, per_row.shape, 0))
        per_row = jnp.where(row < n_rows, per_row, 0.0)

    out_ref[...] += jnp.sum(per_row).reshape(1, 1, 1)


def _plan_row_tiling(rows, n_classes, itemsize, row_tile=None):
    """Pick (row_tile, total_tiles, tiles_per_split, n_splits)."""
    pack = max(8, 32 // max(1, itemsize))        # f32: 8, bf16: 16, int8/fp8: 32
    row_bytes = max(1, n_classes * itemsize)

    if row_tile is None:
        tn = max(pack, (_BLOCK_BUDGET_BYTES // row_bytes) // pack * pack)
        if rows * row_bytes >= _MIN_SPLIT_BYTES:
            # Ensure >= 2 row tiles so the leading "parallel" grid axis has
            # work to shard across TensorCores (v7x has 2 per chip).
            half = pl.cdiv(pl.cdiv(rows, 2), pack) * pack
            tn = min(tn, half)
    else:
        tn = int(row_tile)

    if tn >= rows:
        tn = rows                                 # full-extent block: always legal
    else:
        tn = max(pack, (tn // pack) * pack)       # keep dtype-native sublane pack

    total_tiles = pl.cdiv(rows, tn)
    n_splits = 2 if total_tiles >= 2 else 1
    tiles_per_split = pl.cdiv(total_tiles, n_splits)
    return tn, total_tiles, tiles_per_split, n_splits


def _ce_sum_pallas(logits_knc, targets, row_tile=None):
    """sum_{k,n} [logsumexp(logits[k,n,:]) - logits[k,n,targets[n]]] as an f32 scalar."""
    k_slabs, rows, n_classes = logits_knc.shape
    itemsize = jnp.dtype(logits_knc.dtype).itemsize
    targets2d = jnp.asarray(targets, jnp.int32).reshape(rows, 1)

    tn, total_tiles, tps, n_splits = _plan_row_tiling(rows, n_classes, itemsize,
                                                      row_tile)
    need_mask = (n_splits * tps * tn) != rows

    if n_splits * tps == total_tiles:
        def row_block(c, i):
            return c * tps + i
    else:
        # The 2-way split overruns by one tile (odd tile count): clamp the DMA
        # to the last in-bounds tile; the kernel masks its contribution to 0.
        last_tile = total_tiles - 1

        def row_block(c, i):
            return jnp.minimum(c * tps + i, last_tile)

    block_bytes = tn * n_classes * itemsize + tn * 4
    vmem_limit = int(min(_VMEM_LIMIT_CAP, max(_VMEM_LIMIT_FLOOR, 3 * block_bytes)))

    kernel = functools.partial(_ce_sum_kernel, n_rows=rows, row_tile=tn,
                               tiles_per_split=tps, need_mask=need_mask)

    partials = pl.pallas_call(
        kernel,
        out_shape=jax.ShapeDtypeStruct((n_splits, 1, 1), jnp.float32),
        grid=(n_splits, k_slabs, tps),
        in_specs=[
            pl.BlockSpec((1, tn, n_classes), lambda c, k, i: (k, row_block(c, i), 0)),
            pl.BlockSpec((tn, 1), lambda c, k, i: (row_block(c, i), 0)),
        ],
        out_specs=pl.BlockSpec((1, 1, 1), lambda c, k, i: (c, 0, 0)),
        compiler_params=pltpu.CompilerParams(
            dimension_semantics=("parallel", "arbitrary", "arbitrary"),
            vmem_limit_bytes=vmem_limit),
    )(logits_knc, targets2d)
    return jnp.sum(partials, dtype=jnp.float32)


def cross_entropy_mean_pallas(logits, targets, row_tile=None):
    """mean_n [logsumexp(logits[n]) - logits[n, targets[n]]]  (== nn.CrossEntropyLoss)."""
    logits = jnp.asarray(logits)
    if logits.ndim == 1:
        logits = logits[None, :]
        targets = jnp.asarray(targets).reshape(1)
    rows = logits.shape[0]
    return _ce_sum_pallas(logits[None], targets, row_tile) / rows


def my_cross_entropy_loss(inputs, targets, row_tile=None):
    """Equivalent of MyCrossEntropyLoss.forward."""
    inputs = jnp.asarray(inputs)
    if inputs.ndim <= 2:
        return cross_entropy_mean_pallas(inputs, targets, row_tile)
    if inputs.ndim > 3:
        # TODO(synk): spatial (>3-D) CrossEntropyLoss inputs are never produced
        # by this module's users and are not implemented here.
        raise NotImplementedError(">3-D inputs not supported")
    rows = inputs.shape[0]
    if inputs.shape[2] > 1:
        # Fused live+dead pass: one wrapper transpose presents both slabs as
        # (2, N, C); a single pallas_call streams them with a grid axis over K.
        # Both slabs share the 1/N divisor, so one accumulator per core suffices.
        live_dead = jnp.transpose(inputs[:, :, :2], (2, 0, 1))
        return _ce_sum_pallas(live_dead, targets, row_tile) / rows
    return cross_entropy_mean_pallas(inputs[:, :, 0], targets, row_tile)


class MyCrossEntropyLossPallas:
    """Mirrors MyCrossEntropyLoss (nn.CrossEntropyLoss with default 'mean' reduction)."""

    def __call__(self, inputs, targets):
        return my_cross_entropy_loss(inputs, targets)

    forward = __call__


def _ref_ce(logits, targets):
    logits = logits.astype(jnp.float32)
    lse = jax.nn.logsumexp(logits, axis=-1)
    tgt = jnp.take_along_axis(logits, targets[:, None].astype(jnp.int32), axis=-1)[:, 0]
    return jnp.mean(lse - tgt)


if __name__ == "__main__":
    key = jax.random.PRNGKey(0)
    k1, k2, k3, k4, k5, k6 = jax.random.split(key, 6)

    loss_fn = MyCrossEntropyLossPallas()

    # --- 2-D path: plain cross entropy on (N, C) logits -------------------
    N, C = 8, 32
    logits2d = jax.random.normal(k1, (N, C), jnp.float32)
    targets = jax.random.randint(k2, (N,), 0, C, dtype=jnp.int32)
    out2d = jax.block_until_ready(loss_fn(logits2d, targets))
    ref2d = _ref_ce(logits2d, targets)
    assert jnp.allclose(out2d, ref2d, rtol=1e-5, atol=1e-5), (out2d, ref2d)

    # --- 3-D fused live/dead path (K == 2, single pallas_call) ------------
    logits3d = jax.random.normal(k3, (N, C, 2), jnp.float32)
    out3d = jax.block_until_ready(loss_fn(logits3d, targets))
    ref3d = _ref_ce(logits3d[:, :, 0], targets) + _ref_ce(logits3d[:, :, 1], targets)
    assert jnp.allclose(out3d, ref3d, rtol=1e-5, atol=1e-5), (out3d, ref3d)

    # --- 3-D path with a single "live" slice (K == 1) ----------------------
    out3d1 = jax.block_until_ready(loss_fn(logits2d[:, :, None], targets))
    assert jnp.allclose(out3d1, ref2d, rtol=1e-5, atol=1e-5), (out3d1, ref2d)

    # --- multi-tile, 2-way core split, partial last tile (row masking) -----
    Nb, Cb = 100, 257
    logits_big = jax.random.normal(k4, (Nb, Cb), jnp.float32)
    targets_big = jax.random.randint(k5, (Nb,), 0, Cb, dtype=jnp.int32)
    out_big = jax.block_until_ready(
        cross_entropy_mean_pallas(logits_big, targets_big, row_tile=64))
    ref_big = _ref_ce(logits_big, targets_big)
    assert jnp.allclose(out_big, ref_big, rtol=1e-5, atol=1e-5), (out_big, ref_big)

    # --- fused 3-D path with multiple row tiles + masking -------------------
    logits_big3 = jax.random.normal(k6, (Nb, Cb, 2), jnp.float32)
    out_big3 = jax.block_until_ready(
        my_cross_entropy_loss(logits_big3, targets_big, row_tile=64))
    ref_big3 = (_ref_ce(logits_big3[:, :, 0], targets_big)
                + _ref_ce(logits_big3[:, :, 1], targets_big))
    assert jnp.allclose(out_big3, ref_big3, rtol=1e-5, atol=1e-5), (out_big3, ref_big3)

    # --- odd tile count: exercises the clamped duplicate-tile path ----------
    No = 200
    logits_odd = jax.random.normal(k4, (No, Cb), jnp.float32)
    targets_odd = jax.random.randint(k5, (No,), 0, Cb, dtype=jnp.int32)
    out_odd = jax.block_until_ready(
        cross_entropy_mean_pallas(logits_odd, targets_odd, row_tile=72))
    ref_odd = _ref_ce(logits_odd, targets_odd)
    assert jnp.allclose(out_odd, ref_odd, rtol=1e-5, atol=1e-5), (out_odd, ref_odd)

    # --- auto-planned 2-way split (no explicit row_tile) --------------------
    Na, Ca = 2048, 128
    logits_auto = jax.random.normal(k1, (Na, Ca), jnp.float32)
    targets_auto = jax.random.randint(k2, (Na,), 0, Ca, dtype=jnp.int32)
    out_auto = jax.block_until_ready(loss_fn(logits_auto, targets_auto))
    ref_auto = _ref_ce(logits_auto, targets_auto)
    assert jnp.allclose(out_auto, ref_auto, rtol=1e-4, atol=1e-4), (out_auto, ref_auto)

    # --- bf16 logits (f32 accumulation inside the kernel) -------------------
    out_bf16 = jax.block_until_ready(loss_fn(logits2d.astype(jnp.bfloat16), targets))
    ref_bf16 = _ref_ce(logits2d.astype(jnp.bfloat16), targets)
    assert jnp.allclose(out_bf16, ref_bf16, rtol=2e-2, atol=2e-2), (out_bf16, ref_bf16)

    print("KERNEL_OK")
</pallas_src>

<mosaic_0001>
module attributes {stable_mosaic.version = 11 : i64} {
  func.func @_ce_sum_kernel(%arg0: i32, %arg1: i32, %arg2: i32, %arg3: memref<1x8x32xf32, #tpu.memory_space<vmem>>, %arg4: memref<8x1xi32, #tpu.memory_space<vmem>>, %arg5: memref<1x1x1xf32, #tpu.memory_space<vmem>>) attributes {dimension_semantics = [#tpu.dimension_semantics<parallel>, #tpu.dimension_semantics<arbitrary>, #tpu.dimension_semantics<arbitrary>], iteration_bounds = array<i64: 1, 1, 1>, scalar_prefetch = 0 : i64, scratch_operands = 0 : i64, tpu.core_type = #tpu.core_type<tc>, window_params = [{transform_indices = @transform_0, window_bounds = array<i64: 1, 8, 32>}, {transform_indices = @transform_1, window_bounds = array<i64: 8, 1>}, {transform_indices = @transform_2, window_bounds = array<i64: 1, 1, 1>}]} {
    %c0_i32 = arith.constant 0 : i32
    %0 = arith.cmpi eq, %arg1, %c0_i32 : i32
    %c0_i32_0 = arith.constant 0 : i32
    %1 = arith.cmpi eq, %arg2, %c0_i32_0 : i32
    %2 = arith.andi %0, %1 : i1
    %3 = arith.extui %2 : i1 to i32
    %c0_i32_1 = arith.constant 0 : i32
    %4 = arith.cmpi ne, %3, %c0_i32_1 : i32
    scf.if %4 {
      %cst_16 = arith.constant 0.000000e+00 : f32
      %33 = vector.broadcast %cst_16 : f32 to vector<1x1x1xf32>
      %c0_17 = arith.constant 0 : index
      %c0_18 = arith.constant 0 : index
      %c0_19 = arith.constant 0 : index
      %34 = vector.load %arg5[%c0_17, %c0_18, %c0_19] : memref<1x1x1xf32, #tpu.memory_space<vmem>>, vector<1x1x1xf32>
      tpu.vector_store %arg5[%c0_17, %c0_18, %c0_19], %33 {strides = array<i32>} : memref<1x1x1xf32, #tpu.memory_space<vmem>>, vector<1x1x1xf32>,
    } else {
    }
    %c0 = arith.constant 0 : index
    %c0_2 = arith.constant 0 : index
    %c0_3 = arith.constant 0 : index
    %5 = vector.load %arg3[%c0, %c0_2, %c0_3] : memref<1x8x32xf32, #tpu.memory_space<vmem>>, vector<1x8x32xf32>
    %6 = vector.shape_cast %5 : vector<1x8x32xf32> to vector<8x32xf32>
    %c0_4 = arith.constant 0 : index
    %c0_5 = arith.constant 0 : index
    %7 = vector.load %arg4[%c0_4, %c0_5] : memref<8x1xi32, #tpu.memory_space<vmem>>, vector<8x1xi32>
    %cst = arith.constant dense<0xFF800000> : vector<8xf32>
    %8 = vector.multi_reduction <maximumf>, %6, %cst [1] : vector<8x32xf32> to vector<8xf32>
    %9 = vector.shape_cast %8 : vector<8xf32> to vector<8x1xf32>
    %10 = vector.broadcast %9 : vector<8x1xf32> to vector<8x32xf32>
    %11 = arith.subf %6, %10 : vector<8x32xf32>
    %12 = math.exp %11 : vector<8x32xf32>
    %cst_6 = arith.constant dense<0.000000e+00> : vector<8xf32>
    %13 = vector.multi_reduction <add>, %12, %cst_6 [1] : vector<8x32xf32> to vector<8xf32>
    %14 = vector.shape_cast %13 : vector<8xf32> to vector<8x1xf32>
    %15 = math.log %14 : vector<8x1xf32>
    %16 = arith.addf %9, %15 : vector<8x1xf32>
    %17 = tpu.iota {dimensions = array<i32: 1>} : vector<8x32xi32>
    %18 = vector.broadcast %7 : vector<8x1xi32> to vector<8x32xi32>
    %19 = arith.cmpi eq, %17, %18 : vector<8x32xi32>
    %cst_7 = arith.constant 0.000000e+00 : f32
    %20 = vector.broadcast %cst_7 : f32 to vector<8x32xf32>
    %21 = arith.select %19, %6, %20 : vector<8x32xi1>, vector<8x32xf32>
    %cst_8 = arith.constant dense<0.000000e+00> : vector<8xf32>
    %22 = vector.multi_reduction <add>, %21, %cst_8 [1] : vector<8x32xf32> to vector<8xf32>
    %23 = vector.shape_cast %22 : vector<8xf32> to vector<8x1xf32>
    %24 = arith.subf %16, %23 : vector<8x1xf32>
    %c0_9 = arith.constant 0 : index
    %c0_10 = arith.constant 0 : index
    %c0_11 = arith.constant 0 : index
    %25 = vector.load %arg5[%c0_9, %c0_10, %c0_11] : memref<1x1x1xf32, #tpu.memory_space<vmem>>, vector<1x1x1xf32>
    %26 = vector.shape_cast %24 : vector<8x1xf32> to vector<1x8x1xf32>
    %cst_12 = arith.constant dense<0.000000e+00> : vector<1xf32>
    %27 = vector.multi_reduction <add>, %26, %cst_12 [1, 2] : vector<1x8x1xf32> to vector<1xf32>
    %28 = vector.shape_cast %27 : vector<1xf32> to vector<1x1x1xf32>
    %29 = vector.extract %28[0, 0, 0] : f32 from vector<1x1x1xf32>
    %30 = vector.broadcast %29 : f32 to vector<1x1x1xf32>
    %31 = arith.addf %25, %30 : vector<1x1x1xf32>
    %c0_13 = arith.constant 0 : index
    %c0_14 = arith.constant 0 : index
    %c0_15 = arith.constant 0 : index
    %32 = vector.load %arg5[%c0_13, %c0_14, %c0_15] : memref<1x1x1xf32, #tpu.memory_space<vmem>>, vector<1x1x1xf32>
    tpu.vector_store %arg5[%c0_13, %c0_14, %c0_15], %31 {strides = array<i32>} : memref<1x1x1xf32, #tpu.memory_space<vmem>>, vector<1x1x1xf32>,
    return
  }
  func.func @transform_0(%arg0: i32, %arg1: i32, %arg2: i32) -> (i32, i32, i32) {
    %c1_i32 = arith.constant 1 : i32
    %0 = arith.muli %arg0, %c1_i32 : i32
    %1 = arith.addi %0, %arg2 : i32
    %c0_i32 = arith.constant 0 : i32
    %c0_i32_0 = arith.constant 0 : i32
    return %arg1, %1, %c0_i32 : i32, i32, i32
  }
  func.func @transform_1(%arg0: i32, %arg1: i32, %arg2: i32) -> (i32, i32) {
    %c1_i32 = arith.constant 1 : i32
    %0 = arith.muli %arg0, %c1_i32 : i32
    %1 = arith.addi %0, %arg2 : i32
    %c0_i32 = arith.constant 0 : i32
    %c0_i32_0 = arith.constant 0 : i32
    return %1, %c0_i32 : i32, i32
  }
  func.func @transform_2(%arg0: i32, %arg1: i32, %arg2: i32) -> (i32, i32, i32) {
    %c0_i32 = arith.constant 0 : i32
    %c0_i32_0 = arith.constant 0 : i32
    %c0_i32_1 = arith.constant 0 : i32
    return %arg0, %c0_i32, %c0_i32_0 : i32, i32, i32
  }
}

</mosaic_0001>

<llo_original>
// kernel: tpu_custom_call.1
$region0: #{tpu_custom_call.1}
  #allocation0 [shape = 'u32[]', space=smem, size = 0x4, offset = 0x4, fixed_abs, tag = 'smem constant byte address 0x4 - core index']
  #allocation1 [shape = 'u32[144,128]{1,0:T(1,128)}', space=vmem, size = 0x12000, scoped, tag = 'internal scratch']
  %s0 = inlined_call_operand.vmem [shape: f32[1,8,32], index: 0, kind: input, shape index: {}]
  %s1 = inlined_call_operand.vmem [shape: s32[8,1], index: 1, kind: input, shape index: {}]
  %s2 = inlined_call_operand.hbm [shape: f32[1,1,1], index: 2, kind: output, shape index: {}]
  %s3 = sld [smem:[#allocation0]]
  $region22: #{tpu_custom_call.1} parent=0
    _
  %s5 = ssub.s32 1, %s3
  %s6 = scalar_select 0, %s5, %s3
  $region1: #{tpu_custom_call.1} parent=0
    #allocation2 [shape = 'u8[512]{0}', space=vmem, size = 0x400, scoped, tag = 'output window, operand 0, single buffered']
    #allocation3 [shape = 's32[1]{0}', space=sflag, size = 0x4, scoped, tag = 'scoped memory for tpu_custom_call.1']
    %7 = vsyncpa [#allocation3], 0
    // Predicated region
    $region2: #{tpu_custom_call.1} parent=1 // pred_check
      _
    $region3: #{tpu_custom_call.1} parent=1 // pred_check_branch
      %9 = sbr.rel (0) target = $region5
    $region4: #{tpu_custom_call.1} parent=1 // pred_region
      %s10 = sadd.s32 0, 0
      %p11 = scmp.lt.s32.totalorder %s10, 0
      %s12 = scalar_select %p11, %s10, 0
      %s13 = smul.addr %s12, 8
      %s14 = scalar_lea.vmem %s0, %s13
      %s15 = sadd.s32 0, 0
    $region5: #{tpu_custom_call.1} parent=1 // pred_fallthru
      _
    // Predicated region
    $region6: #{tpu_custom_call.1} parent=1 // pred_check
      _
    $region7: #{tpu_custom_call.1} parent=1 // pred_check_branch
      %17 = sbr.rel (0) target = $region9
    $region8: #{tpu_custom_call.1} parent=1 // pred_region
      %s18 = sadd.s32 0, 0
      %p19 = scmp.lt.s32.totalorder %s18, 0
      %s20 = scalar_select %p19, %s18, 0
      %s21 = smul.addr %s20, 8
      %s22 = scalar_lea.vmem %s1, %s21
      %s23 = sadd.s32 0, 0
    $region9: #{tpu_custom_call.1} parent=1 // pred_fallthru
      _
    %s24 = sadd.s32 0, 0
    %p25 = scmp.lt.s32.totalorder %s24, 0
    %s26 = scalar_select %p25, %s24, 0
    %s27 = smul.addr %s26, 8
    %s28 = scalar_lea.vmem %s0, %s27
    %s29 = sadd.s32 0, 0
    %p30 = scmp.lt.s32.totalorder %s29, 0
    %s31 = scalar_select %p30, %s29, 0
    %s32 = smul.addr %s31, 8
    %s33 = scalar_lea.vmem %s1, %s32
    %s34 = sadd.s32 0, 0
    %p35 = scmp.lt.s32.totalorder %s34, 0
    %s36 = scalar_select %p35, %s34, 0
    %s37 = smul.addr %s36, 8
    %s38 = scalar_lea.vmem %s0, %s37
    %s39 = sadd.s32 0, 0
    %s40 = sadd.s32 0, 0
    %p41 = scmp.lt.s32.totalorder %s40, 0
    %s42 = scalar_select %p41, %s40, 0
    %s43 = smul.addr %s42, 8
    %s44 = scalar_lea.vmem %s1, %s43
    %s45 = sadd.s32 0, 0
    %p46 = scmp.eq.s32.totalorder 0, 0
    %p47 = scmp.eq.s32.totalorder 0, 0
    %p48 = pnand %p46, %p47
    %p49 = pneg %p48
    // Predicated region
    $region10: #{tpu_custom_call.1} parent=1 // pred_check
      _
    $region11: #{tpu_custom_call.1} parent=1 // pred_check_branch
      %51 = sbr.rel (%p48) target = $region13
    $region12: #{tpu_custom_call.1} parent=1 // pred_region
      %vm52 = vcmask 0
      %53 = vst.msk [vmem:[#allocation2] sm:$0x1] %vm52, 0.0
    $region13: #{tpu_custom_call.1} parent=1 // pred_fallthru
      _
    %v54 = vld [vmem:[%s38] sm:$0xff]
    %v55 = vld [vmem:[%s44] sm:$0xff]
    %vm56 = vcmask 261120
    %v57 = vsel %vm56, %v54, -inf
    %58 = vmax.xlane.f32.xlu0 %v57
    %v59 = vpop.xlane.xlu0 %58
    %v60 = vsub.f32 %v54, %v59
    %v61 = vmul.f32 %v60, 1.442695
    %v62 = vpow.pop %v61
    %v63 = vsel %vm56, %v62, 0.0
    %64 = vadd.xlane.f32.xlu0 %v63
    %v65 = vpop.xlane.xlu0 %64
    %v66 = vlog2.pop %v65
    %v67 = vmul.f32 %v66, 0.6931472
    %v68 = vadd.f32 %v59, %v67
    %v69 = vlaneseq
    %v70 = vand.u32 %v69, 127
    %71 = vset.pattern.permute.xlu0 0
    %72 = vperm.xlu0 %71, %v55
    %v73 = vpop.permute.xlu0 %72
    %vm74 = vcmp.eq.s32.totalorder %v70, %v73
    %v75 = vsel %vm74, %v54, 0.0
    %v76 = vsel %vm56, %v75, 0.0
    %77 = vadd.xlane.f32.xlu0 %v76
    %v78 = vpop.xlane.xlu0 %77
    %v79 = vsub.f32 %v68, %v78
    %v80 = vld [vmem:[#allocation2] sm:$0x1]
    %vm81 = vcmask 7168
    %v82 = vsel %vm81, %v79, 0.0
    %83 = vadd.xlane.f32.xlu0 %v82
    %v84 = vpop.xlane.xlu0 %83
    %v85 = vrot.slane %v84, 4
    %v86 = vadd.f32 %v84, %v85
    %v87 = vrot.slane %v86, 2
    %v88 = vadd.f32 %v86, %v87
    %v89 = vrot.slane %v88, 1
    %v90 = vadd.f32 %v88, %v89
    %s91 = vtos %v90
    %v92 = vstv %s91
    %v93 = vadd.f32 %v80, %v92
    %vm94 = vcmask 0
    %95 = vst.msk [vmem:[#allocation2] sm:$0x1] %vm94, %v93
    // Predicated region
    $region14: #{tpu_custom_call.1} parent=1 // pred_check
      _
    $region15: #{tpu_custom_call.1} parent=1 // pred_check_branch
      %97 = sbr.rel (0) target = $region17
    $region16: #{tpu_custom_call.1} parent=1 // pred_region
      %s99 = ssub.s32 16, 16
      %100 = vsyncadd [#allocation3], %s99
      %s102 = sshll.u32 [#allocation2], 4
      %s103 = int_to_ptr.vmem [resolvable:$true] %s102
      %105 = dma.vmem_to_hbm [thread:$0]  %s103, 16, %s2, [#allocation3]
    $region17: #{tpu_custom_call.1} parent=1 // pred_fallthru
      _
    // Predicated region
    $region18: #{tpu_custom_call.1} parent=1 // pred_check
      _
    $region19: #{tpu_custom_call.1} parent=1 // pred_check_branch
      %107 = sbr.rel (0) target = $region21
    $region20: #{tpu_custom_call.1} parent=1 // pred_region
      %108 = dma.done [#allocation3], 16
    $region21: #{tpu_custom_call.1} parent=1 // pred_fallthru
      _
    %109 = vsyncpa [#allocation3], 1

</llo_original>
